<compile_context>
chip_gen: v7x
topology: tpu7x:2x2x1
jax: 0.10.0
libtpu: 0.0.40
codegen_flags: <defaults>
</compile_context>

<pallas_src>
import functools
import math

import jax
import jax.numpy as jnp
from jax import lax
from jax.experimental import pallas as pl
from jax.experimental.pallas import tpu as pltpu

_NEG_INF = -1e30  # finite "minus infinity": avoids inf-inf NaN corner cases


def _cosface_kernel(x_ref, w_ref, invw_ref, label_ref, alpha_ref, loss_ref,
                    inv_x_s, m_s, l_s, t_s, *, s, m, gamma, eps, c_valid, block_c):
    j = pl.program_id(1)

    # ---- per-N-tile init (first C tile only): row norms + online-softmax state
    @pl.when(j == 0)
    def _():
        x_f32 = x_ref[...].astype(jnp.float32)
        x_sq = jnp.sum(x_f32 * x_f32, axis=1, keepdims=True)
        # clamp each norm at eps (matches the reference clamp on the product
        # for any non-degenerate input)
        inv_x_s[...] = lax.rsqrt(jnp.maximum(x_sq, eps * eps))
        m_s[...] = jnp.full_like(m_s, _NEG_INF)
        l_s[...] = jnp.zeros_like(l_s)
        t_s[...] = jnp.zeros_like(t_s)

    # ---- cosine similarity for this (N tile, C tile) ----
    # contract over D on both operands (no w transpose), f32 accumulation.
    ip = lax.dot_general(
        x_ref[...], w_ref[...],
        dimension_numbers=(((1,), (1,)), ((), ())),
        preferred_element_type=jnp.float32)                       # (TN, TC)
    cosine = (ip * inv_x_s[...]) * invw_ref[...]                  # (TN, TC)

    label = label_ref[...]                                        # (TN, 1) int32
    alpha = alpha_ref[...].astype(jnp.float32)                    # (TN, 1)

    class_ids = block_c * j + lax.broadcasted_iota(jnp.int32, cosine.shape, 1)
    target_mask = class_ids == label                              # (TN, TC) bool
    valid = class_ids < c_valid                                   # padded-class mask

    dyn_m = m * (0.5 + 2.0 * alpha * (1.0 - alpha))               # (TN, 1)
    logits = s * cosine - jnp.where(target_mask, s * dyn_m, 0.0)
    logits = jnp.where(valid, logits, _NEG_INF)

    # ---- online logsumexp across C tiles ----
    m_new = jnp.maximum(m_s[...], jnp.max(logits, axis=1, keepdims=True))
    scale = jnp.exp(m_s[...] - m_new)
    l_s[...] = scale * l_s[...] + jnp.sum(jnp.exp(logits - m_new),
                                          axis=1, keepdims=True)
    m_s[...] = m_new
    t_s[...] = t_s[...] + jnp.sum(jnp.where(target_mask, logits, 0.0),
                                  axis=1, keepdims=True)

    # ---- finalize: per-sample focal CosFace loss (written once per N tile) ----
    @pl.when(j == pl.num_programs(1) - 1)
    def _():
        bce = (m_s[...] + jnp.log(l_s[...])) - t_s[...]           # (TN, 1)
        pt = jnp.exp(-bce)
        focal = jnp.power(jnp.maximum(1.0 - pt, 0.0), gamma)
        loss_ref[...] = alpha * focal * bce


def _round_up(a, b):
    return ((a + b - 1) // b) * b


def _maybe_pad2(a, rows, cols):
    pr, pc = rows - a.shape[0], cols - a.shape[1]
    if pr == 0 and pc == 0:
        return a
    return jnp.pad(a, ((0, pr), (0, pc)))


def cosface_loss(x, weight, label, alpha, *, s=30.0, m=0.4, gamma=3.5, eps=1e-8,
                 block_n=128, block_c=512, vmem_limit_bytes=64 * 1024 * 1024):
    """Forward pass of CosFaceLoss: mean(alpha * (1-pt)^gamma * CE(cosface_logits)).

    x      : (N, D) features (f32 or bf16; the matmul runs in this dtype)
    weight : (C, D) class weights (cast to x.dtype for the matmul)
    label  : (N,)   int class ids
    alpha  : (N,)   per-sample focal alpha
    """
    N, D = x.shape
    C, Dw = weight.shape
    assert D == Dw, (D, Dw)

    mm_dtype = x.dtype if x.dtype in (jnp.bfloat16, jnp.float32) else jnp.float32
    x_mm = x.astype(mm_dtype)
    w_mm = weight.astype(mm_dtype)

    sub = 16 if mm_dtype == jnp.bfloat16 else 8
    block_n = _round_up(min(block_n, _round_up(N, sub)), sub)
    block_c = _round_up(min(block_c, _round_up(C, 128)), 128)
    n_pad = _round_up(N, block_n)
    c_pad = _round_up(C, block_c)
    d_pad = _round_up(D, 128)

    # per-class inverse norms computed once here (avoids an in-kernel
    # (C,1)->(1,C) transpose); streamed into the kernel as a (1, C_pad) input.
    w_f32 = weight.astype(jnp.float32)
    inv_w = 1.0 / jnp.maximum(jnp.sqrt(jnp.sum(w_f32 * w_f32, axis=1)), eps)   # (C,)

    x_p = _maybe_pad2(x_mm, n_pad, d_pad)
    w_p = _maybe_pad2(w_mm, c_pad, d_pad)
    invw_p = _maybe_pad2(inv_w.reshape(1, C).astype(jnp.float32), 1, c_pad)
    label_p = _maybe_pad2(label.astype(jnp.int32).reshape(N, 1), n_pad, 1)
    alpha_p = _maybe_pad2(alpha.astype(jnp.float32).reshape(N, 1), n_pad, 1)

    n_tiles = n_pad // block_n
    c_tiles = c_pad // block_c

    kernel = functools.partial(
        _cosface_kernel, s=float(s), m=float(m), gamma=float(gamma),
        eps=float(eps), c_valid=C, block_c=block_c)

    itemsize = jnp.dtype(mm_dtype).itemsize
    cost = pl.CostEstimate(
        flops=2 * n_pad * c_pad * d_pad,
        transcendentals=2 * n_pad * c_pad,
        bytes_accessed=(n_pad * d_pad + n_tiles * c_pad * d_pad) * itemsize
                       + c_pad * 4 + n_pad * 3 * 4)

    grid_spec = pltpu.PrefetchScalarGridSpec(
        num_scalar_prefetch=0,
        grid=(n_tiles, c_tiles),
        in_specs=[
            pl.BlockSpec((block_n, d_pad), lambda i, j: (i, 0)),   # x (resident over j)
            pl.BlockSpec((block_c, d_pad), lambda i, j: (j, 0)),   # weight (streamed)
            pl.BlockSpec((1, block_c), lambda i, j: (0, j)),       # 1 / ||w|| per class
            pl.BlockSpec((block_n, 1), lambda i, j: (i, 0)),       # label
            pl.BlockSpec((block_n, 1), lambda i, j: (i, 0)),       # alpha
        ],
        out_specs=pl.BlockSpec((block_n, 1), lambda i, j: (i, 0)),
        scratch_shapes=[
            pltpu.VMEM((block_n, 1), jnp.float32),   # 1 / ||x|| per row
            pltpu.VMEM((block_n, 1), jnp.float32),   # running max
            pltpu.VMEM((block_n, 1), jnp.float32),   # running sum-exp
            pltpu.VMEM((block_n, 1), jnp.float32),   # target logit
        ],
    )

    per_sample = pl.pallas_call(
        kernel,
        out_shape=jax.ShapeDtypeStruct((n_pad, 1), jnp.float32),
        grid_spec=grid_spec,
        compiler_params=pltpu.CompilerParams(
            dimension_semantics=("parallel", "arbitrary"),
            vmem_limit_bytes=vmem_limit_bytes),
        cost_estimate=cost,
    )(x_p, w_p, invw_p, label_p, alpha_p)

    # final mean over the real (unpadded) rows: cheap, left to XLA.
    return jnp.mean(per_sample[:N, 0])


def _reference(xv, wv, lbl, al, s=30.0, m=0.4, gamma=3.5, eps=1e-8):
    xv = xv.astype(jnp.float32)
    wv = wv.astype(jnp.float32)
    ip = xv @ wv.T
    denom = jnp.clip(jnp.linalg.norm(xv, axis=1, keepdims=True)
                     * jnp.linalg.norm(wv, axis=1)[None, :], eps, None)
    cos = ip / denom
    oh = jax.nn.one_hot(lbl, wv.shape[0], dtype=jnp.float32)
    dm = m * (0.5 + 2.0 * al * (1.0 - al))
    logits = s * (cos - dm[:, None] * oh)
    lse = jax.nn.logsumexp(logits, axis=1)
    bce = lse - jnp.sum(logits * oh, axis=1)
    return jnp.mean(al * (1.0 - jnp.exp(-bce)) ** gamma * bce)


if __name__ == "__main__":
    in_features = 32
    out_features = 4
    batch = 8

    key = jax.random.PRNGKey(0)
    k_w, k_x, k_l, k_a = jax.random.split(key, 4)

    # nn.init.xavier_uniform_: U(-a, a), a = sqrt(6 / (fan_in + fan_out))
    bound = math.sqrt(6.0 / (in_features + out_features))
    weight = jax.random.uniform(k_w, (out_features, in_features), jnp.float32,
                                minval=-bound, maxval=bound)
    x = jax.random.normal(k_x, (batch, in_features), jnp.float32)
    label = jax.random.randint(k_l, (batch,), 0, out_features, jnp.int32)
    alpha = jax.random.uniform(k_a, (batch,), jnp.float32)

    # --- float32 path (matches the PyTorch module's input.float()) ---
    loss_f32 = cosface_loss(x, weight, label, alpha, s=30.0, m=0.4, gamma=3.5)
    jax.block_until_ready(loss_f32)
    ref_f32 = _reference(x, weight, label, alpha)
    assert jnp.allclose(loss_f32, ref_f32, rtol=1e-3, atol=1e-4), (loss_f32, ref_f32)

    # --- bf16 fast path (bf16 operands on the MXU, f32 accumulation/math) ---
    x_bf = x.astype(jnp.bfloat16)
    w_bf = weight.astype(jnp.bfloat16)
    loss_bf = cosface_loss(x_bf, w_bf, label, alpha, s=30.0, m=0.4, gamma=3.5)
    jax.block_until_ready(loss_bf)
    ref_bf = _reference(x_bf, w_bf, label, alpha)
    assert jnp.allclose(loss_bf, ref_bf, rtol=2e-2, atol=2e-2), (loss_bf, ref_bf)

    print("KERNEL_OK")
</pallas_src>

<mosaic_0001>
module attributes {stable_mosaic.version = 11 : i64} {
  func.func @_cosface_kernel(%arg0: i32, %arg1: i32, %arg2: memref<8x128xf32, #tpu.memory_space<vmem>>, %arg3: memref<128x128xf32, #tpu.memory_space<vmem>>, %arg4: memref<1x128xf32, #tpu.memory_space<vmem>>, %arg5: memref<8x1xi32, #tpu.memory_space<vmem>>, %arg6: memref<8x1xf32, #tpu.memory_space<vmem>>, %arg7: memref<8x1xf32, #tpu.memory_space<vmem>>, %arg8: memref<8x1xf32, #tpu.memory_space<vmem>>, %arg9: memref<8x1xf32, #tpu.memory_space<vmem>>, %arg10: memref<8x1xf32, #tpu.memory_space<vmem>>, %arg11: memref<8x1xf32, #tpu.memory_space<vmem>>) attributes {dimension_semantics = [#tpu.dimension_semantics<parallel>, #tpu.dimension_semantics<arbitrary>], iteration_bounds = array<i64: 1, 1>, scalar_prefetch = 0 : i64, scratch_operands = 4 : i64, tpu.core_type = #tpu.core_type<tc>, window_params = [{transform_indices = @transform_0, window_bounds = array<i64: 8, 128>}, {transform_indices = @transform_1, window_bounds = array<i64: 128, 128>}, {transform_indices = @transform_2, window_bounds = array<i64: 1, 128>}, {transform_indices = @transform_3, window_bounds = array<i64: 8, 1>}, {transform_indices = @transform_4, window_bounds = array<i64: 8, 1>}, {transform_indices = @transform_5, window_bounds = array<i64: 8, 1>}]} {
    %c0_i32 = arith.constant 0 : i32
    %0 = arith.cmpi eq, %arg1, %c0_i32 : i32
    %1 = arith.extui %0 : i1 to i32
    %c0_i32_0 = arith.constant 0 : i32
    %2 = arith.cmpi ne, %1, %c0_i32_0 : i32
    scf.if %2 {
      %c0_40 = arith.constant 0 : index
      %c0_41 = arith.constant 0 : index
      %69 = vector.load %arg2[%c0_40, %c0_41] : memref<8x128xf32, #tpu.memory_space<vmem>>, vector<8x128xf32>
      %70 = arith.mulf %69, %69 : vector<8x128xf32>
      %cst_42 = arith.constant dense<0.000000e+00> : vector<8xf32>
      %71 = vector.multi_reduction <add>, %70, %cst_42 [1] : vector<8x128xf32> to vector<8xf32>
      %72 = vector.shape_cast %71 : vector<8xf32> to vector<8x1xf32>
      %cst_43 = arith.constant 1.000000e-16 : f32
      %73 = vector.broadcast %cst_43 : f32 to vector<8x1xf32>
      %74 = arith.maximumf %72, %73 : vector<8x1xf32>
      %75 = math.rsqrt %74 : vector<8x1xf32>
      %c0_44 = arith.constant 0 : index
      %c0_45 = arith.constant 0 : index
      %76 = vector.load %arg8[%c0_44, %c0_45] : memref<8x1xf32, #tpu.memory_space<vmem>>, vector<8x1xf32>
      tpu.vector_store %arg8[%c0_44, %c0_45], %75 {strides = array<i32>} : memref<8x1xf32, #tpu.memory_space<vmem>>, vector<8x1xf32>,
      %cst_46 = arith.constant -1.000000e+30 : f32
      %77 = vector.broadcast %cst_46 : f32 to vector<8x1xf32>
      %c0_47 = arith.constant 0 : index
      %c0_48 = arith.constant 0 : index
      %78 = vector.load %arg9[%c0_47, %c0_48] : memref<8x1xf32, #tpu.memory_space<vmem>>, vector<8x1xf32>
      tpu.vector_store %arg9[%c0_47, %c0_48], %77 {strides = array<i32>} : memref<8x1xf32, #tpu.memory_space<vmem>>, vector<8x1xf32>,
      %cst_49 = arith.constant 0.000000e+00 : f32
      %79 = vector.broadcast %cst_49 : f32 to vector<8x1xf32>
      %c0_50 = arith.constant 0 : index
      %c0_51 = arith.constant 0 : index
      %80 = vector.load %arg10[%c0_50, %c0_51] : memref<8x1xf32, #tpu.memory_space<vmem>>, vector<8x1xf32>
      tpu.vector_store %arg10[%c0_50, %c0_51], %79 {strides = array<i32>} : memref<8x1xf32, #tpu.memory_space<vmem>>, vector<8x1xf32>,
      %cst_52 = arith.constant 0.000000e+00 : f32
      %81 = vector.broadcast %cst_52 : f32 to vector<8x1xf32>
      %c0_53 = arith.constant 0 : index
      %c0_54 = arith.constant 0 : index
      %82 = vector.load %arg11[%c0_53, %c0_54] : memref<8x1xf32, #tpu.memory_space<vmem>>, vector<8x1xf32>
      tpu.vector_store %arg11[%c0_53, %c0_54], %81 {strides = array<i32>} : memref<8x1xf32, #tpu.memory_space<vmem>>, vector<8x1xf32>,
    } else {
    }
    %c0 = arith.constant 0 : index
    %c0_1 = arith.constant 0 : index
    %3 = vector.load %arg2[%c0, %c0_1] : memref<8x128xf32, #tpu.memory_space<vmem>>, vector<8x128xf32>
    %c0_2 = arith.constant 0 : index
    %c0_3 = arith.constant 0 : index
    %4 = vector.load %arg3[%c0_2, %c0_3] : memref<128x128xf32, #tpu.memory_space<vmem>>, vector<128x128xf32>
    %cst = arith.constant dense<0.000000e+00> : vector<8x128xf32>
    %5 = tpu.matmul %3, %4, %cst {dimension_numbers = #tpu.dot_dimension_numbers<[1], [1], [0], [0], [0, 0, 1, 0], [], []>} : vector<8x128xf32>, vector<128x128xf32>, vector<8x128xf32> -> vector<8x128xf32>
    %c0_4 = arith.constant 0 : index
    %c0_5 = arith.constant 0 : index
    %6 = vector.load %arg8[%c0_4, %c0_5] : memref<8x1xf32, #tpu.memory_space<vmem>>, vector<8x1xf32>
    %7 = vector.broadcast %6 : vector<8x1xf32> to vector<8x128xf32>
    %8 = arith.mulf %5, %7 : vector<8x128xf32>
    %c0_6 = arith.constant 0 : index
    %c0_7 = arith.constant 0 : index
    %9 = vector.load %arg4[%c0_6, %c0_7] : memref<1x128xf32, #tpu.memory_space<vmem>>, vector<1x128xf32>
    %10 = vector.broadcast %9 : vector<1x128xf32> to vector<8x128xf32>
    %11 = arith.mulf %8, %10 : vector<8x128xf32>
    %c0_8 = arith.constant 0 : index
    %c0_9 = arith.constant 0 : index
    %12 = vector.load %arg5[%c0_8, %c0_9] : memref<8x1xi32, #tpu.memory_space<vmem>>, vector<8x1xi32>
    %c0_10 = arith.constant 0 : index
    %c0_11 = arith.constant 0 : index
    %13 = vector.load %arg6[%c0_10, %c0_11] : memref<8x1xf32, #tpu.memory_space<vmem>>, vector<8x1xf32>
    %c128_i32 = arith.constant 128 : i32
    %14 = arith.muli %c128_i32, %arg1 : i32
    %15 = tpu.iota {dimensions = array<i32: 1>} : vector<8x128xi32>
    %16 = vector.broadcast %14 : i32 to vector<8x128xi32>
    %17 = arith.addi %16, %15 : vector<8x128xi32>
    %18 = vector.broadcast %12 : vector<8x1xi32> to vector<8x128xi32>
    %19 = arith.cmpi eq, %17, %18 : vector<8x128xi32>
    %c4_i32 = arith.constant 4 : i32
    %20 = vector.broadcast %c4_i32 : i32 to vector<8x128xi32>
    %21 = arith.cmpi slt, %17, %20 : vector<8x128xi32>
    %cst_12 = arith.constant 2.000000e+00 : f32
    %22 = vector.broadcast %cst_12 : f32 to vector<8x1xf32>
    %23 = arith.mulf %22, %13 : vector<8x1xf32>
    %cst_13 = arith.constant 1.000000e+00 : f32
    %24 = vector.broadcast %cst_13 : f32 to vector<8x1xf32>
    %25 = arith.subf %24, %13 : vector<8x1xf32>
    %26 = arith.mulf %23, %25 : vector<8x1xf32>
    %cst_14 = arith.constant 5.000000e-01 : f32
    %27 = vector.broadcast %cst_14 : f32 to vector<8x1xf32>
    %28 = arith.addf %27, %26 : vector<8x1xf32>
    %cst_15 = arith.constant 4.000000e-01 : f32
    %29 = vector.broadcast %cst_15 : f32 to vector<8x1xf32>
    %30 = arith.mulf %29, %28 : vector<8x1xf32>
    %cst_16 = arith.constant 3.000000e+01 : f32
    %31 = vector.broadcast %cst_16 : f32 to vector<8x128xf32>
    %32 = arith.mulf %31, %11 : vector<8x128xf32>
    %cst_17 = arith.constant 3.000000e+01 : f32
    %33 = vector.broadcast %cst_17 : f32 to vector<8x1xf32>
    %34 = arith.mulf %33, %30 : vector<8x1xf32>
    %cst_18 = arith.constant 0.000000e+00 : f32
    %35 = vector.shape_cast %34 : vector<8x1xf32> to vector<8x1xf32>
    %36 = vector.broadcast %35 : vector<8x1xf32> to vector<8x128xf32>
    %37 = vector.broadcast %cst_18 : f32 to vector<8x128xf32>
    %38 = arith.select %19, %36, %37 : vector<8x128xi1>, vector<8x128xf32>
    %39 = arith.subf %32, %38 : vector<8x128xf32>
    %cst_19 = arith.constant -1.000000e+30 : f32
    %40 = vector.broadcast %cst_19 : f32 to vector<8x128xf32>
    %41 = arith.select %21, %39, %40 : vector<8x128xi1>, vector<8x128xf32>
    %c0_20 = arith.constant 0 : index
    %c0_21 = arith.constant 0 : index
    %42 = vector.load %arg9[%c0_20, %c0_21] : memref<8x1xf32, #tpu.memory_space<vmem>>, vector<8x1xf32>
    %cst_22 = arith.constant dense<0xFF800000> : vector<8xf32>
    %43 = vector.multi_reduction <maximumf>, %41, %cst_22 [1] : vector<8x128xf32> to vector<8xf32>
    %44 = vector.shape_cast %43 : vector<8xf32> to vector<8x1xf32>
    %45 = arith.maximumf %42, %44 : vector<8x1xf32>
    %c0_23 = arith.constant 0 : index
    %c0_24 = arith.constant 0 : index
    %46 = vector.load %arg9[%c0_23, %c0_24] : memref<8x1xf32, #tpu.memory_space<vmem>>, vector<8x1xf32>
    %47 = arith.subf %46, %45 : vector<8x1xf32>
    %48 = math.exp %47 : vector<8x1xf32>
    %c0_25 = arith.constant 0 : index
    %c0_26 = arith.constant 0 : index
    %49 = vector.load %arg10[%c0_25, %c0_26] : memref<8x1xf32, #tpu.memory_space<vmem>>, vector<8x1xf32>
    %50 = arith.mulf %48, %49 : vector<8x1xf32>
    %51 = vector.broadcast %45 : vector<8x1xf32> to vector<8x128xf32>
    %52 = arith.subf %41, %51 : vector<8x128xf32>
    %53 = math.exp %52 : vector<8x128xf32>
    %cst_27 = arith.constant dense<0.000000e+00> : vector<8xf32>
    %54 = vector.multi_reduction <add>, %53, %cst_27 [1] : vector<8x128xf32> to vector<8xf32>
    %55 = vector.shape_cast %54 : vector<8xf32> to vector<8x1xf32>
    %56 = arith.addf %50, %55 : vector<8x1xf32>
    %c0_28 = arith.constant 0 : index
    %c0_29 = arith.constant 0 : index
    %57 = vector.load %arg10[%c0_28, %c0_29] : memref<8x1xf32, #tpu.memory_space<vmem>>, vector<8x1xf32>
    tpu.vector_store %arg10[%c0_28, %c0_29], %56 {strides = array<i32>} : memref<8x1xf32, #tpu.memory_space<vmem>>, vector<8x1xf32>,
    %c0_30 = arith.constant 0 : index
    %c0_31 = arith.constant 0 : index
    %58 = vector.load %arg9[%c0_30, %c0_31] : memref<8x1xf32, #tpu.memory_space<vmem>>, vector<8x1xf32>
    tpu.vector_store %arg9[%c0_30, %c0_31], %45 {strides = array<i32>} : memref<8x1xf32, #tpu.memory_space<vmem>>, vector<8x1xf32>,
    %c0_32 = arith.constant 0 : index
    %c0_33 = arith.constant 0 : index
    %59 = vector.load %arg11[%c0_32, %c0_33] : memref<8x1xf32, #tpu.memory_space<vmem>>, vector<8x1xf32>
    %cst_34 = arith.constant 0.000000e+00 : f32
    %60 = vector.broadcast %cst_34 : f32 to vector<8x128xf32>
    %61 = arith.select %19, %41, %60 : vector<8x128xi1>, vector<8x128xf32>
    %cst_35 = arith.constant dense<0.000000e+00> : vector<8xf32>
    %62 = vector.multi_reduction <add>, %61, %cst_35 [1] : vector<8x128xf32> to vector<8xf32>
    %63 = vector.shape_cast %62 : vector<8xf32> to vector<8x1xf32>
    %64 = arith.addf %59, %63 : vector<8x1xf32>
    %c0_36 = arith.constant 0 : index
    %c0_37 = arith.constant 0 : index
    %65 = vector.load %arg11[%c0_36, %c0_37] : memref<8x1xf32, #tpu.memory_space<vmem>>, vector<8x1xf32>
    tpu.vector_store %arg11[%c0_36, %c0_37], %64 {strides = array<i32>} : memref<8x1xf32, #tpu.memory_space<vmem>>, vector<8x1xf32>,
    %c0_i32_38 = arith.constant 0 : i32
    %66 = arith.cmpi eq, %arg1, %c0_i32_38 : i32
    %67 = arith.extui %66 : i1 to i32
    %c0_i32_39 = arith.constant 0 : i32
    %68 = arith.cmpi ne, %67, %c0_i32_39 : i32
    scf.if %68 {
      %c0_40 = arith.constant 0 : index
      %c0_41 = arith.constant 0 : index
      %69 = vector.load %arg9[%c0_40, %c0_41] : memref<8x1xf32, #tpu.memory_space<vmem>>, vector<8x1xf32>
      %c0_42 = arith.constant 0 : index
      %c0_43 = arith.constant 0 : index
      %70 = vector.load %arg10[%c0_42, %c0_43] : memref<8x1xf32, #tpu.memory_space<vmem>>, vector<8x1xf32>
      %71 = math.log %70 : vector<8x1xf32>
      %72 = arith.addf %69, %71 : vector<8x1xf32>
      %c0_44 = arith.constant 0 : index
      %c0_45 = arith.constant 0 : index
      %73 = vector.load %arg11[%c0_44, %c0_45] : memref<8x1xf32, #tpu.memory_space<vmem>>, vector<8x1xf32>
      %74 = arith.subf %72, %73 : vector<8x1xf32>
      %cst_46 = arith.constant 0.000000e+00 : f32
      %75 = vector.broadcast %cst_46 : f32 to vector<8x1xf32>
      %76 = arith.subf %75, %74 : vector<8x1xf32>
      %77 = math.exp %76 : vector<8x1xf32>
      %cst_47 = arith.constant 1.000000e+00 : f32
      %78 = vector.broadcast %cst_47 : f32 to vector<8x1xf32>
      %79 = arith.subf %78, %77 : vector<8x1xf32>
      %cst_48 = arith.constant 0.000000e+00 : f32
      %80 = vector.broadcast %cst_48 : f32 to vector<8x1xf32>
      %81 = arith.maximumf %79, %80 : vector<8x1xf32>
      %cst_49 = arith.constant 3.500000e+00 : f32
      %82 = vector.broadcast %cst_49 : f32 to vector<8x1xf32>
      %83 = math.powf %81, %82 : vector<8x1xf32>
      %84 = arith.mulf %13, %83 : vector<8x1xf32>
      %85 = arith.mulf %84, %74 : vector<8x1xf32>
      %c0_50 = arith.constant 0 : index
      %c0_51 = arith.constant 0 : index
      %86 = vector.load %arg7[%c0_50, %c0_51] : memref<8x1xf32, #tpu.memory_space<vmem>>, vector<8x1xf32>
      tpu.vector_store %arg7[%c0_50, %c0_51], %85 {strides = array<i32>} : memref<8x1xf32, #tpu.memory_space<vmem>>, vector<8x1xf32>,
    } else {
    }
    return
  }
  func.func @transform_0(%arg0: i32, %arg1: i32) -> (i32, i32) {
    %c0_i32 = arith.constant 0 : i32
    %c0_i32_0 = arith.constant 0 : i32
    return %arg0, %c0_i32 : i32, i32
  }
  func.func @transform_1(%arg0: i32, %arg1: i32) -> (i32, i32) {
    %c0_i32 = arith.constant 0 : i32
    %c0_i32_0 = arith.constant 0 : i32
    return %arg1, %c0_i32 : i32, i32
  }
  func.func @transform_2(%arg0: i32, %arg1: i32) -> (i32, i32) {
    %c0_i32 = arith.constant 0 : i32
    %c0_i32_0 = arith.constant 0 : i32
    return %c0_i32, %arg1 : i32, i32
  }
  func.func @transform_3(%arg0: i32, %arg1: i32) -> (i32, i32) {
    %c0_i32 = arith.constant 0 : i32
    %c0_i32_0 = arith.constant 0 : i32
    return %arg0, %c0_i32 : i32, i32
  }
  func.func @transform_4(%arg0: i32, %arg1: i32) -> (i32, i32) {
    %c0_i32 = arith.constant 0 : i32
    %c0_i32_0 = arith.constant 0 : i32
    return %arg0, %c0_i32 : i32, i32
  }
  func.func @transform_5(%arg0: i32, %arg1: i32) -> (i32, i32) {
    %c0_i32 = arith.constant 0 : i32
    %c0_i32_0 = arith.constant 0 : i32
    return %arg0, %c0_i32 : i32, i32
  }
}

</mosaic_0001>

<llo_original>
// kernel: tpu_custom_call.1
$region0: #{tpu_custom_call.1}
  #allocation0 [shape = 'u32[]', space=smem, size = 0x4, offset = 0x4, fixed_abs, tag = 'smem constant byte address 0x4 - core index']
  #allocation1 [shape = 'u32[144,128]{1,0:T(1,128)}', space=vmem, size = 0x12000, scoped, tag = 'internal scratch']
  #allocation2 [shape = 'f32[8,1]{1,0:T(8,128)}', space=vmem, size = 0x1000, scoped, tag = 'scratch operand']
  #allocation3 [shape = 'f32[8,1]{1,0:T(8,128)}', space=vmem, size = 0x1000, scoped, tag = 'scratch operand']
  #allocation4 [shape = 'f32[8,1]{1,0:T(8,128)}', space=vmem, size = 0x1000, scoped, tag = 'scratch operand']
  #allocation5 [shape = 'f32[8,1]{1,0:T(8,128)}', space=vmem, size = 0x1000, scoped, tag = 'scratch operand']
  %s0 = inlined_call_operand.hbm [shape: f32[8,128], index: 0, kind: input, shape index: {}]
  %s1 = inlined_call_operand.hbm [shape: f32[128,128], index: 1, kind: input, shape index: {}]
  %s2 = inlined_call_operand.hbm [shape: f32[1,128], index: 2, kind: input, shape index: {}]
  %s3 = inlined_call_operand.hbm [shape: s32[8,1], index: 3, kind: input, shape index: {}]
  %s4 = inlined_call_operand.hbm [shape: f32[8,1], index: 4, kind: input, shape index: {}]
  %s5 = inlined_call_operand.hbm [shape: f32[8,1], index: 5, kind: output, shape index: {}]
  %s6 = sld [smem:[#allocation0]]
  $region58: #{tpu_custom_call.1} parent=0
    _
  %s8 = ssub.s32 1, %s6
  %s9 = scalar_select 0, %s8, %s6
  $region1: #{tpu_custom_call.1} parent=0
    #allocation6 [shape = 'u8[4096]{0}', space=vmem, size = 0x1000, scoped, tag = 'input window, operand 0, single buffered']
    #allocation7 [shape = 's32[1]{0}', space=sflag, size = 0x4, scoped, tag = 'scoped memory for tpu_custom_call.1']
    #allocation8 [shape = 's32[1]{0}', space=sflag, size = 0x4, scoped, tag = 'scoped memory for tpu_custom_call.1']
    #allocation9 [shape = 'u8[65536]{0}', space=vmem, size = 0x10000, scoped, tag = 'input window, operand 1, single buffered']
    #allocation10 [shape = 's32[1]{0}', space=sflag, size = 0x4, scoped, tag = 'scoped memory for tpu_custom_call.1']
    #allocation11 [shape = 'u8[512]{0}', space=vmem, size = 0x400, scoped, tag = 'input window, operand 2, single buffered']
    #allocation12 [shape = 'u8[4096]{0}', space=vmem, size = 0x1000, scoped, tag = 'input window, operand 3, single buffered']
    #allocation13 [shape = 's32[1]{0}', space=sflag, size = 0x4, scoped, tag = 'scoped memory for tpu_custom_call.1']
    #allocation14 [shape = 'u8[4096]{0}', space=vmem, size = 0x1000, scoped, tag = 'input window, operand 4, single buffered']
    #allocation15 [shape = 'u8[4096]{0}', space=vmem, size = 0x1000, scoped, tag = 'output window, operand 0, single buffered']
    %10 = vsyncpa [#allocation7], 0
    %11 = vsyncpa [#allocation10], 0
    %12 = vsyncpa [#allocation13], 0
    %13 = vsyncpa [#allocation8], 0
    // Predicated region
    $region2: #{tpu_custom_call.1} parent=1 // pred_check
      _
    $region3: #{tpu_custom_call.1} parent=1 // pred_check_branch
      %15 = sbr.rel (0) target = $region5
    $region4: #{tpu_custom_call.1} parent=1 // pred_region
      %s17 = ssub.s32 128, 128
      %18 = vsyncadd [#allocation7], %s17
      %s20 = sshll.u32 [#allocation6], 4
      %s21 = int_to_ptr.vmem [resolvable:$true] %s20
      %23 = dma.hbm_to_vmem [thread:$0]  %s0, 128, %s21, [#allocation7]
    $region5: #{tpu_custom_call.1} parent=1 // pred_fallthru
      _
    // Predicated region
    $region6: #{tpu_custom_call.1} parent=1 // pred_check
      _
    $region7: #{tpu_custom_call.1} parent=1 // pred_check_branch
      %25 = sbr.rel (0) target = $region9
    $region8: #{tpu_custom_call.1} parent=1 // pred_region
      %s27 = ssub.s32 2048, 2048
      %28 = vsyncadd [#allocation10], %s27
      %s29 = sshll.u32 [#allocation9], 4
      %s30 = int_to_ptr.vmem [resolvable:$true] %s29
      %35 = dma.hbm_to_vmem [thread:$0]  %s1, 2048, %s30, [#allocation10], 128, 128, 8
    $region9: #{tpu_custom_call.1} parent=1 // pred_fallthru
      _
    // Predicated region
    $region10: #{tpu_custom_call.1} parent=1 // pred_check
      _
    $region11: #{tpu_custom_call.1} parent=1 // pred_check_branch
      %37 = sbr.rel (0) target = $region13
    $region12: #{tpu_custom_call.1} parent=1 // pred_region
      %s39 = ssub.s32 16, 16
      %40 = vsyncadd [#allocation10], %s39
      %s42 = sshll.u32 [#allocation11], 4
      %s43 = int_to_ptr.vmem [resolvable:$true] %s42
      %45 = dma.hbm_to_vmem [thread:$0]  %s2, 16, %s43, [#allocation10]
    $region13: #{tpu_custom_call.1} parent=1 // pred_fallthru
      _
    // Predicated region
    $region14: #{tpu_custom_call.1} parent=1 // pred_check
      _
    $region15: #{tpu_custom_call.1} parent=1 // pred_check_branch
      %47 = sbr.rel (0) target = $region17
    $region16: #{tpu_custom_call.1} parent=1 // pred_region
      %s49 = ssub.s32 128, 128
      %50 = vsyncadd [#allocation13], %s49
      %s52 = sshll.u32 [#allocation12], 4
      %s53 = int_to_ptr.vmem [resolvable:$true] %s52
      %55 = dma.hbm_to_vmem [thread:$0]  %s3, 128, %s53, [#allocation13]
    $region17: #{tpu_custom_call.1} parent=1 // pred_fallthru
      _
    // Predicated region
    $region18: #{tpu_custom_call.1} parent=1 // pred_check
      _
    $region19: #{tpu_custom_call.1} parent=1 // pred_check_branch
      %57 = sbr.rel (0) target = $region21
    $region20: #{tpu_custom_call.1} parent=1 // pred_region
      %s59 = ssub.s32 128, 128
      %60 = vsyncadd [#allocation13], %s59
      %s62 = sshll.u32 [#allocation14], 4
      %s63 = int_to_ptr.vmem [resolvable:$true] %s62
      %65 = dma.hbm_to_vmem [thread:$0]  %s4, 128, %s63, [#allocation13]
    $region21: #{tpu_custom_call.1} parent=1 // pred_fallthru
      _
    // Predicated region
    $region22: #{tpu_custom_call.1} parent=1 // pred_check
      _
    $region23: #{tpu_custom_call.1} parent=1 // pred_check_branch
      %67 = sbr.rel (0) target = $region25
    $region24: #{tpu_custom_call.1} parent=1 // pred_region
      %68 = dma.done [#allocation7], 128
    $region25: #{tpu_custom_call.1} parent=1 // pred_fallthru
      _
    // Predicated region
    $region26: #{tpu_custom_call.1} parent=1 // pred_check
      _
    $region27: #{tpu_custom_call.1} parent=1 // pred_check_branch
      %70 = sbr.rel (0) target = $region29
    $region28: #{tpu_custom_call.1} parent=1 // pred_region
      %71 = dma.done [#allocation10], 2048
    $region29: #{tpu_custom_call.1} parent=1 // pred_fallthru
      _
    // Predicated region
    $region30: #{tpu_custom_call.1} parent=1 // pred_check
      _
    $region31: #{tpu_custom_call.1} parent=1 // pred_check_branch
      %73 = sbr.rel (0) target = $region33
    $region32: #{tpu_custom_call.1} parent=1 // pred_region
      %74 = dma.done [#allocation10], 16
    $region33: #{tpu_custom_call.1} parent=1 // pred_fallthru
      _
    // Predicated region
    $region34: #{tpu_custom_call.1} parent=1 // pred_check
      _
    $region35: #{tpu_custom_call.1} parent=1 // pred_check_branch
      %76 = sbr.rel (0) target = $region37
    $region36: #{tpu_custom_call.1} parent=1 // pred_region
      %77 = dma.done [#allocation13], 128
    $region37: #{tpu_custom_call.1} parent=1 // pred_fallthru
      _
    // Predicated region
    $region38: #{tpu_custom_call.1} parent=1 // pred_check
      _
    $region39: #{tpu_custom_call.1} parent=1 // pred_check_branch
      %79 = sbr.rel (0) target = $region41
    $region40: #{tpu_custom_call.1} parent=1 // pred_region
      %80 = dma.done [#allocation13], 128
    $region41: #{tpu_custom_call.1} parent=1 // pred_fallthru
      _
    %p81 = scmp.eq.s32.totalorder 0, 0
    // Predicated region
    $region42: #{tpu_custom_call.1} parent=1 // pred_check
      %p82 = pneg %p81
    $region43: #{tpu_custom_call.1} parent=1 // pred_check_branch
      %84 = sbr.rel (%p82) target = $region45
    $region44: #{tpu_custom_call.1} parent=1 // pred_region
      %v85 = vld [vmem:[#allocation6] sm:$0xff]
      %v86 = vmul.f32 %v85, %v85
      %87 = vadd.xlane.f32.xlu0 %v86
      %v88 = vpop.xlane.xlu0 %87
      %v89 = vmax.f32 %v88, 1e-16
      %v90 = vrsqrt.pop %v89
      %vm91 = vcmask 7168
      %92 = vst.msk [vmem:[#allocation2] sm:$0xff] %vm91, %v90
      %93 = vst.msk [vmem:[#allocation3] sm:$0xff] %vm91, -1e+30
      %94 = vst.msk [vmem:[#allocation4] sm:$0xff] %vm91, 0.0
      %95 = vst.msk [vmem:[#allocation5] sm:$0xff] %vm91, 0.0
    $region45: #{tpu_custom_call.1} parent=1 // pred_fallthru
      _
    %v96 = vld [vmem:[#allocation6] sm:$0xff]
    %v97 = vld [vmem:[#allocation9] sm:$0xff]
    %v98 = vld [vmem:[#allocation9 + $0x8] sm:$0xff]
    %v99 = vld [vmem:[#allocation9 + $0x10] sm:$0xff]
    %v100 = vld [vmem:[#allocation9 + $0x18] sm:$0xff]
    %v101 = vld [vmem:[#allocation9 + $0x20] sm:$0xff]
    %v102 = vld [vmem:[#allocation9 + $0x28] sm:$0xff]
    %v103 = vld [vmem:[#allocation9 + $0x30] sm:$0xff]
    %v104 = vld [vmem:[#allocation9 + $0x38] sm:$0xff]
    %v105 = vld [vmem:[#allocation9 + $0x40] sm:$0xff]
    %v106 = vld [vmem:[#allocation9 + $0x48] sm:$0xff]
    %v107 = vld [vmem:[#allocation9 + $0x50] sm:$0xff]
    %v108 = vld [vmem:[#allocation9 + $0x58] sm:$0xff]
    %v109 = vld [vmem:[#allocation9 + $0x60] sm:$0xff]
    %v110 = vld [vmem:[#allocation9 + $0x68] sm:$0xff]
    %v111 = vld [vmem:[#allocation9 + $0x70] sm:$0xff]
    %v112 = vld [vmem:[#allocation9 + $0x78] sm:$0xff]
    %113 = vmatprep.subr.mxu0 0.0
    %114 = vmatpush1.xpose.msra.mxu0 %v97
    %115 = vmatprep.subr.mxu0 0.0
    %116 = vmatpush1.xpose.msra.mxu0 %v98
    %117 = vmatprep.subr.mxu0 0.0
    %118 = vmatpush1.xpose.msra.mxu0 %v99
    %119 = vmatprep.subr.mxu0 0.0
    %120 = vmatpush1.xpose.msra.mxu0 %v100
    %121 = vmatprep.subr.mxu0 0.0
    %122 = vmatpush1.xpose.msra.mxu0 %v101
    %123 = vmatprep.subr.mxu0 0.0
    %124 = vmatpush1.xpose.msra.mxu0 %v102
    %125 = vmatprep.subr.mxu0 0.0
    %126 = vmatpush1.xpose.msra.mxu0 %v103
    %127 = vmatprep.subr.mxu0 0.0
    %128 = vmatpush1.xpose.msra.mxu0 %v104
    %129 = vmatprep.subr.mxu0 0.0
    %130 = vmatpush1.xpose.msra.mxu0 %v105
    %131 = vmatprep.subr.mxu0 0.0
    %132 = vmatpush1.xpose.msra.mxu0 %v106
    %133 = vmatprep.subr.mxu0 0.0
    %134 = vmatpush1.xpose.msra.mxu0 %v107
    %135 = vmatprep.subr.mxu0 0.0
    %136 = vmatpush1.xpose.msra.mxu0 %v108
    %137 = vmatprep.subr.mxu0 0.0
    %138 = vmatpush1.xpose.msra.mxu0 %v109
    %139 = vmatprep.subr.mxu0 0.0
    %140 = vmatpush1.xpose.msra.mxu0 %v110
    %141 = vmatprep.subr.mxu0 0.0
    %142 = vmatpush1.xpose.msra.mxu0 %v111
    %143 = vmatprep.subr.mxu0 0.0
    %144 = vmatpush1.xpose.msra.mxu0 %v112
    %145 = vmatprep.subr.mxu0 0.0
    %146 = vmatpush1.xpose.msra.mxu0 0.0
    %147 = vmatprep.subr.mxu0 0.0
    %148 = vmatpush1.xpose.msra.mxu0 0.0
    %149 = vmatprep.subr.mxu0 0.0
    %150 = vmatpush1.xpose.msra.mxu0 0.0
    %151 = vmatprep.subr.mxu0 0.0
    %152 = vmatpush1.xpose.msra.mxu0 0.0
    %153 = vmatprep.subr.mxu0 0.0
    %154 = vmatpush1.xpose.msra.mxu0 0.0
    %155 = vmatprep.subr.mxu0 0.0
    %156 = vmatpush1.xpose.msra.mxu0 0.0
    %157 = vmatprep.subr.mxu0 0.0
    %158 = vmatpush1.xpose.msra.mxu0 0.0
    %159 = vmatprep.subr.mxu0 0.0
    %160 = vmatpush1.xpose.msra.mxu0 0.0
    %161 = vmatprep.subr.mxu0 0.0
    %162 = vmatpush1.xpose.msra.mxu0 0.0
    %163 = vmatprep.subr.mxu0 0.0
    %164 = vmatpush1.xpose.msra.mxu0 0.0
    %165 = vmatprep.subr.mxu0 0.0
    %166 = vmatpush1.xpose.msra.mxu0 0.0
    %167 = vmatprep.subr.mxu0 0.0
    %168 = vmatpush1.xpose.msra.mxu0 0.0
    %169 = vmatprep.subr.mxu0 0.0
    %170 = vmatpush1.xpose.msra.mxu0 0.0
    %171 = vmatprep.subr.mxu0 0.0
    %172 = vmatpush1.xpose.msra.mxu0 0.0
    %173 = vmatprep.subr.mxu0 0.0
    %174 = vmatpush1.xpose.msra.mxu0 0.0
    %175 = vmatprep.subr.mxu0 0.0
    %176 = vmatpush1.xpose.msra.mxu0 0.0
    %177 = vmatprep.mubr.f32.mxu0 0.0
    %178 = vmatmul.mubr.f32.gmra.mrb[0].mxu0 %v96
    %v179 = vpop.f32.mrb[0].mxu0
    %v180 = vadd.f32 0.0, %v179
    %v181 = vpop.f32.mrb[0].mxu0
    %182 = vdwg.mxu0
    %v183 = vld [vmem:[#allocation2] sm:$0xff]
    %185 = vset.pattern.permute.xlu0 0
    %186 = vperm.xlu0 %185, %v183
    %v187 = vpop.permute.xlu0 %186
    %v189 = vmul.f32 %v180, %v187
    %v190 = vld [vmem:[#allocation11] sm:$0x1]
    %v192 = vlaneseq
    %v193 = vshrl.u32 %v192, 7
    %v194 = vsub.s32 0, %v193
    %v195 = vrot.slane %v190, %v194
    %v197 = vmul.f32 %v189, %v195
    %v198 = vld [vmem:[#allocation12] sm:$0xff]
    %v199 = vld [vmem:[#allocation14] sm:$0xff]
    %s200 = smul.u32 0, 128
    %v201 = vlaneseq
    %v202 = vand.u32 %v201, 127
    %v203 = vstv %s200
    %v204 = vadd.s32 %v203, %v202
    %205 = vset.pattern.permute.xlu0 0
    %206 = vperm.xlu0 %205, %v198
    %v207 = vpop.permute.xlu0 %206
    %vm208 = vcmp.eq.s32.totalorder %v204, %v207
    %vm209 = vcmp.lt.s32.totalorder %v204, 4
    %v210 = vmul.f32 %v199, 2.0
    %v211 = vsub.f32 1.0, %v199
    %v212 = vmul.f32 %v210, %v211
    %v213 = vadd.f32 %v212, 0.5
    %v214 = vmul.f32 %v213, 0.4
    %v215 = vmul.f32 %v197, 30.0
    %v216 = vmul.f32 %v214, 30.0
    %218 = vset.pattern.permute.xlu0 0
    %219 = vperm.xlu0 %218, %v216
    %v220 = vpop.permute.xlu0 %219
    %v222 = vsel %vm208, %v220, 0.0
    %v223 = vsub.f32 %v215, %v222
    %v224 = vsel %vm209, %v223, -1e+30
    %v225 = vld [vmem:[#allocation3] sm:$0xff]
    %226 = vmax.xlane.f32.xlu0 %v224
    %v227 = vpop.xlane.xlu0 %226
    %v228 = vmax.f32 %v225, %v227
    %v229 = vsub.f32 %v225, %v228
    %v230 = vmul.f32 %v229, 1.442695
    %v231 = vpow.pop %v230
    %v232 = vld [vmem:[#allocation4] sm:$0xff]
    %v233 = vmul.f32 %v231, %v232
    %235 = vset.pattern.permute.xlu0 0
    %236 = vperm.xlu0 %235, %v228
    %v237 = vpop.permute.xlu0 %236
    %v239 = vsub.f32 %v224, %v237
    %v240 = vmul.f32 %v239, 1.442695
    %v241 = vpow.pop %v240
    %242 = vadd.xlane.f32.xlu0 %v241
    %v243 = vpop.xlane.xlu0 %242
    %v244 = vadd.f32 %v233, %v243
    %vm245 = vcmask 7168
    %246 = vst.msk [vmem:[#allocation4] sm:$0xff] %vm245, %v244
    %247 = vst.msk [vmem:[#allocation3] sm:$0xff] %vm245, %v228
    %v248 = vld [vmem:[#allocation5] sm:$0xff]
    %v249 = vsel %vm208, %v224, 0.0
    %250 = vadd.xlane.f32.xlu0 %v249
    %v251 = vpop.xlane.xlu0 %250
    %v252 = vadd.f32 %v248, %v251
    %253 = vst.msk [vmem:[#allocation5] sm:$0xff] %vm245, %v252
    // Predicated region
    $region46: #{tpu_custom_call.1} parent=1 // pred_check
      %p254 = pneg %p81
    $region47: #{tpu_custom_call.1} parent=1 // pred_check_branch
      %256 = sbr.rel (%p254) target = $region49
    $region48: #{tpu_custom_call.1} parent=1 // pred_region
      %v257 = vld [vmem:[#allocation3] sm:$0xff]
      %v258 = vld [vmem:[#allocation4] sm:$0xff]
      %v259 = vlog2.pop %v258
      %v260 = vmul.f32 %v259, 0.6931472
      %v261 = vadd.f32 %v257, %v260
      %v262 = vld [vmem:[#allocation5] sm:$0xff]
      %v263 = vsub.f32 %v261, %v262
      %v264 = vsub.f32 0.0, %v263
      %v265 = vmul.f32 %v264, 1.442695
      %v266 = vpow.pop %v265
      %v267 = vsub.f32 1.0, %v266
      %v268 = vmax.f32 %v267, 0.0
      %v269 = vpow.f32 %v268, 3.5
      %v270 = vmul.f32 %v199, %v269
      %v271 = vmul.f32 %v270, %v263
      %272 = vst.msk [vmem:[#allocation15] sm:$0xff] %vm245, %v271
    $region49: #{tpu_custom_call.1} parent=1 // pred_fallthru
      _
    // Predicated region
    $region50: #{tpu_custom_call.1} parent=1 // pred_check
      _
    $region51: #{tpu_custom_call.1} parent=1 // pred_check_branch
      %274 = sbr.rel (0) target = $region53
    $region52: #{tpu_custom_call.1} parent=1 // pred_region
      %s276 = ssub.s32 128, 128
      %277 = vsyncadd [#allocation8], %s276
      %s279 = sshll.u32 [#allocation15], 4
      %s280 = int_to_ptr.vmem [resolvable:$true] %s279
      %282 = dma.vmem_to_hbm [thread:$0]  %s280, 128, %s5, [#allocation8]
    $region53: #{tpu_custom_call.1} parent=1 // pred_fallthru
      _
    // Predicated region
    $region54: #{tpu_custom_call.1} parent=1 // pred_check
      _
    $region55: #{tpu_custom_call.1} parent=1 // pred_check_branch
      %284 = sbr.rel (0) target = $region57
    $region56: #{tpu_custom_call.1} parent=1 // pred_region
      %285 = dma.done [#allocation8], 128
    $region57: #{tpu_custom_call.1} parent=1 // pred_fallthru
      _
    %286 = vsyncpa [#allocation7], 1
    %287 = vsyncpa [#allocation10], 1
    %288 = vsyncpa [#allocation13], 1
    %289 = vsyncpa [#allocation8], 1

</llo_original>
